<compile_context>
chip_gen: v7x
topology: tpu7x:2x2x1
jax: 0.10.0
libtpu: 0.0.40
codegen_flags: <defaults>
</compile_context>

<pallas_src>
import functools

import jax
import jax.numpy as jnp
from jax.experimental import pallas as pl
from jax.experimental.pallas import tpu as pltpu


# ----------------------------------------------------------------------------
# Helpers
# ----------------------------------------------------------------------------
def _round_up(x, m):
    return ((x + m - 1) // m) * m


# Scoped-VMEM limit: safe on every generation (v7x physical VMEM is 64 MiB per
# TensorCore).  On v5e/v6e (128 MiB physical) callers may raise it to ~96 MiB.
_DEFAULT_VMEM_LIMIT = 48 << 20


def _choose_batch_tile(B, n_drugs, n_latent, *, emb_itemsize, out_itemsize,
                       vmem_limit, max_tile=1024):
    """Pick the largest batch tile whose double-buffered (drugs, out) tiles fit
    in the scoped-VMEM budget after reserving space for the grid-invariant
    (embedding + beta/bias/c0) blocks (counted twice: default double buffer)."""
    kp = _round_up(n_drugs, 128)
    np_ = _round_up(n_latent, 128)
    resident = 2 * (_round_up(n_drugs, 8) * np_ * emb_itemsize    # embedding
                    + 3 * 8 * kp * 4)                             # beta/bias/c0 tiles
    budget = max(vmem_limit - resident - (4 << 20), 2 << 20)      # headroom
    per_row = 2 * (kp * 4 + np_ * out_itemsize)                   # dbl-buffered rows
    tb = budget // per_row
    tb = min(tb, max_tile, _round_up(B, 8))
    # Guarantee >= 2 grid steps so the "parallel" batch axis can be split across
    # the two v7x TensorCores (no-op on single-TC v5e/v6e, no-op for tiny B).
    if B >= 16:
        tb = min(tb, _round_up((B + 1) // 2, 8))
    # Fill the MXU M dimension: multiples of 256 when large, else multiples of 8.
    if tb >= 256:
        tb = (tb // 256) * 256
    else:
        tb = max(8, (tb // 8) * 8)
    return int(tb)


# ----------------------------------------------------------------------------
# Branch A: generalized (log-)sigmoid dose scaling fused with the projection
# onto the drug embedding.  Batch-tiled grid; beta/bias/c0/emb grid-invariant.
# ----------------------------------------------------------------------------
def _drugnet_combinatorial_kernel(drugs_ref, beta_ref, bias_ref, c0_ref, emb_ref,
                                  out_ref, *, log_dose):
    x = drugs_ref[...]                                     # (TB, n_drugs) f32
    if log_dose:
        x = jnp.log1p(x)
    z = x * beta_ref[...] + bias_ref[...]
    # sigmoid(z) = 0.5*(tanh(z/2)+1): a single EUP transcendental per element.
    # c0 = sigmoid(bias) is precomputed in the wrapper (hoisted off the EUP).
    scaled = 0.5 * jnp.tanh(0.5 * z) + (0.5 - c0_ref[...])
    out_ref[...] = jnp.dot(
        scaled.astype(emb_ref.dtype), emb_ref[...],
        preferred_element_type=jnp.float32,
    ).astype(out_ref.dtype)


def drug_network_forward(drugs, beta, bias, emb, *, non_linearity="logsigm",
                         use_bf16_matmul=False, out_dtype=None,
                         batch_tile=None, vmem_limit_bytes=_DEFAULT_VMEM_LIMIT):
    """Branch A: drugs (B, n_drugs) float doses; returns (B, n_latent)."""
    assert non_linearity in ("logsigm", "sigm")
    drugs = jnp.asarray(drugs, jnp.float32)
    beta = jnp.asarray(beta, jnp.float32).reshape(1, -1)
    bias = jnp.asarray(bias, jnp.float32).reshape(1, -1)

    B, n_drugs = drugs.shape
    n_latent = emb.shape[-1]
    mxu_dtype = jnp.bfloat16 if use_bf16_matmul else jnp.float32
    emb = jnp.asarray(emb).astype(mxu_dtype)               # no-op for the f32 default
    out_dtype = jnp.float32 if out_dtype is None else out_dtype
    c0 = jax.nn.sigmoid(bias)                              # hoisted out of the kernel

    TB = batch_tile or _choose_batch_tile(
        B, n_drugs, n_latent,
        emb_itemsize=jnp.dtype(mxu_dtype).itemsize,
        out_itemsize=jnp.dtype(out_dtype).itemsize,
        vmem_limit=vmem_limit_bytes)
    grid = (int(pl.cdiv(B, TB)),)
    # TODO(synk): for very large n_drugs/n_latent the resident embedding block
    # would need K/N grid tiling with an f32 accumulator.

    cost = pl.CostEstimate(
        flops=int(2 * B * n_drugs * n_latent),
        transcendentals=int(B * n_drugs),
        bytes_accessed=int(4 * B * n_drugs
                           + jnp.dtype(out_dtype).itemsize * B * n_latent
                           + jnp.dtype(mxu_dtype).itemsize * n_drugs * n_latent
                           + 3 * 4 * n_drugs),
    )

    kernel = functools.partial(_drugnet_combinatorial_kernel,
                               log_dose=(non_linearity == "logsigm"))

    out = pl.pallas_call(
        kernel,
        out_shape=jax.ShapeDtypeStruct((B, n_latent), out_dtype),
        grid=grid,
        in_specs=[
            pl.BlockSpec((TB, n_drugs), lambda i: (i, 0)),        # drugs (batch-tiled)
            pl.BlockSpec((1, n_drugs), lambda i: (0, 0)),         # beta  (grid-invariant)
            pl.BlockSpec((1, n_drugs), lambda i: (0, 0)),         # bias
            pl.BlockSpec((1, n_drugs), lambda i: (0, 0)),         # c0 = sigmoid(bias)
            pl.BlockSpec((n_drugs, n_latent), lambda i: (0, 0)),  # embedding weight
        ],
        out_specs=pl.BlockSpec((TB, n_latent), lambda i: (i, 0)),
        compiler_params=pltpu.CompilerParams(
            dimension_semantics=("parallel",),
            vmem_limit_bytes=int(vmem_limit_bytes)),
        cost_estimate=cost,
    )(drugs, beta, bias, c0, emb)
    return out


# ----------------------------------------------------------------------------
# Branch B: per-sample dose scaling, then row-wise scaling of the embedding.
# TB rows per grid step; embedding resident in VMEM; ids/scales in SMEM; the
# row gather happens in-kernel (dynamic index), so nothing extra hits HBM.
# ----------------------------------------------------------------------------
def _drugnet_indexed_kernel(ids_ref, scaled_ref, emb_ref, out_ref, *, tb):
    base = pl.program_id(0) * tb

    def body(r, carry):
        row = base + r
        idx = ids_ref[row]                                  # scalar from SMEM
        s = scaled_ref[row]                                 # scalar from SMEM
        out_ref[pl.ds(r, 1), :] = (s * emb_ref[pl.ds(idx, 1), :]).astype(out_ref.dtype)
        return carry

    jax.lax.fori_loop(0, tb, body, 0)


def drug_network_forward_indexed(drug_ids, doses, beta, bias, emb, *,
                                 non_linearity="logsigm", batch_tile=None,
                                 vmem_limit_bytes=_DEFAULT_VMEM_LIMIT):
    """Branch B: drug_ids (B,) int, doses (B,) float; returns (B, n_latent)."""
    assert non_linearity in ("logsigm", "sigm")
    drug_ids = jnp.asarray(drug_ids).astype(jnp.int32).reshape(-1)
    doses = jnp.asarray(doses, jnp.float32).reshape(-1)
    beta = jnp.asarray(beta, jnp.float32).reshape(-1)
    bias = jnp.asarray(bias, jnp.float32).reshape(-1)
    emb = jnp.asarray(emb, jnp.float32)

    B = doses.shape[0]
    n_drugs, n_latent = emb.shape

    # Tiny per-sample parameter gather + dose scaling: B scalars, stays in XLA.
    beta_g = beta[drug_ids]
    bias_g = bias[drug_ids]
    x = jnp.log1p(doses) if non_linearity == "logsigm" else doses
    scaled = jax.nn.sigmoid(x * beta_g + bias_g) - jax.nn.sigmoid(bias_g)   # (B,)

    TB = batch_tile or min(128, _round_up(B, 8))
    if B >= 16:                      # >= 2 programs on the parallel axis (v7x)
        TB = min(TB, _round_up((B + 1) // 2, 8))
    TB = max(8, (TB // 8) * 8)
    n_steps = int(pl.cdiv(B, TB))
    Bp = n_steps * TB

    # Pad the two tiny 1-D control arrays so the in-kernel SMEM reads of the
    # last (ragged) tile never go out of bounds; the extra rows compute
    # 0.0 * emb[0] and are discarded on the masked writeback of the last block.
    ids_p = jnp.zeros((Bp,), jnp.int32).at[:B].set(drug_ids)
    scaled_p = jnp.zeros((Bp,), jnp.float32).at[:B].set(scaled)

    # TODO(synk): if the embedding table ever exceeds VMEM, switch its spec to
    # pl.ANY and row-gather with a manual double-buffered make_async_copy.
    kernel = functools.partial(_drugnet_indexed_kernel, tb=TB)
    out = pl.pallas_call(
        kernel,
        out_shape=jax.ShapeDtypeStruct((B, n_latent), jnp.float32),
        grid=(n_steps,),
        in_specs=[
            pl.BlockSpec(memory_space=pltpu.MemorySpace.SMEM),     # drug ids (Bp,)
            pl.BlockSpec(memory_space=pltpu.MemorySpace.SMEM),     # scaled   (Bp,)
            pl.BlockSpec((n_drugs, n_latent), lambda i: (0, 0)),   # embedding resident
        ],
        out_specs=pl.BlockSpec((TB, n_latent), lambda i: (i, 0)),
        compiler_params=pltpu.CompilerParams(
            dimension_semantics=("parallel",),
            vmem_limit_bytes=int(vmem_limit_bytes)),
    )(ids_p, scaled_p, emb)
    return out


# ----------------------------------------------------------------------------
# Pure-JAX references (mirror the PyTorch code) for sanity checks.
# ----------------------------------------------------------------------------
def _ref_combinatorial(drugs, beta, bias, emb):
    c0 = jax.nn.sigmoid(bias)
    scaled = jax.nn.sigmoid(jnp.log1p(drugs) * beta + bias) - c0
    return scaled @ emb


def _ref_indexed(drug_ids, doses, beta, bias, emb):
    drug_ids = drug_ids.astype(jnp.int32).reshape(-1)
    doses = doses.astype(jnp.float32).reshape(-1)
    b = bias[0][drug_ids]
    be = beta[0][drug_ids]
    scaled = jax.nn.sigmoid(jnp.log1p(doses) * be + b) - jax.nn.sigmoid(b)
    return scaled[:, None] * emb[drug_ids]


if __name__ == "__main__":
    # Note: at these toy shapes the kernel is overhead-dominated; the design
    # targets realistic B / n_drugs / n_latent (batch grid, VMEM-budgeted tiles).
    B, n_drugs, n_latent = 8, 16, 32

    key = jax.random.PRNGKey(0)
    k_emb, k_drugs, k_ids, k_doses, k_beta, k_bias = jax.random.split(key, 6)

    # Parameters (matching __init__ shapes, perturbed so the check is non-trivial).
    emb = jax.random.normal(k_emb, (n_drugs, n_latent), dtype=jnp.float32)
    beta = 1.0 + 0.1 * jax.random.normal(k_beta, (1, n_drugs), dtype=jnp.float32)
    bias = 0.1 * jax.random.normal(k_bias, (1, n_drugs), dtype=jnp.float32)

    # ---- Branch A: combinatorial dose matrix -------------------------------
    drugs = jax.random.uniform(k_drugs, (B, n_drugs), dtype=jnp.float32) * 2.0
    ref_a = _ref_combinatorial(drugs, beta, bias, emb)

    # f32 MXU path (default): tight tolerance.
    out_a32 = jax.block_until_ready(drug_network_forward(drugs, beta, bias, emb))
    assert out_a32.shape == (B, n_latent)
    assert jnp.allclose(out_a32, ref_a, atol=1e-4, rtol=1e-4)

    # bf16 MXU operands: looser tolerance.
    out_a16 = jax.block_until_ready(
        drug_network_forward(drugs, beta, bias, emb, use_bf16_matmul=True))
    assert out_a16.shape == (B, n_latent)
    assert jnp.allclose(out_a16, ref_a, atol=1e-1, rtol=5e-2)

    # Ragged batch (B not a multiple of the tile): exercises the masked writeback.
    B2 = 10
    drugs2 = jax.random.uniform(k_drugs, (B2, n_drugs), dtype=jnp.float32) * 2.0
    out_a_rag = jax.block_until_ready(
        drug_network_forward(drugs2, beta, bias, emb, batch_tile=8))
    assert out_a_rag.shape == (B2, n_latent)
    assert jnp.allclose(out_a_rag, _ref_combinatorial(drugs2, beta, bias, emb),
                        atol=1e-4, rtol=1e-4)

    # ---- Branch B: per-sample drug id + dose -------------------------------
    drug_ids = jax.random.randint(k_ids, (B,), 0, n_drugs)
    doses = jax.random.uniform(k_doses, (B,), dtype=jnp.float32) * 2.0
    out_b = jax.block_until_ready(
        drug_network_forward_indexed(drug_ids, doses, beta, bias, emb))
    assert out_b.shape == (B, n_latent)
    assert jnp.allclose(out_b, _ref_indexed(drug_ids, doses, beta, bias, emb),
                        atol=1e-5, rtol=1e-5)

    # Ragged batch for the indexed branch too.
    drug_ids2 = jax.random.randint(k_ids, (B2,), 0, n_drugs)
    doses2 = jax.random.uniform(k_doses, (B2,), dtype=jnp.float32) * 2.0
    out_b_rag = jax.block_until_ready(
        drug_network_forward_indexed(drug_ids2, doses2, beta, bias, emb, batch_tile=8))
    assert out_b_rag.shape == (B2, n_latent)
    assert jnp.allclose(out_b_rag, _ref_indexed(drug_ids2, doses2, beta, bias, emb),
                        atol=1e-5, rtol=1e-5)

    print("KERNEL_OK")
</pallas_src>

<mosaic_0001>
module attributes {stable_mosaic.version = 11 : i64} {
  func.func @_drugnet_combinatorial_kernel(%arg0: i32, %arg1: memref<8x16xf32, #tpu.memory_space<vmem>>, %arg2: memref<1x16xf32, #tpu.memory_space<vmem>>, %arg3: memref<1x16xf32, #tpu.memory_space<vmem>>, %arg4: memref<1x16xf32, #tpu.memory_space<vmem>>, %arg5: memref<16x32xf32, #tpu.memory_space<vmem>>, %arg6: memref<8x32xf32, #tpu.memory_space<vmem>>) attributes {dimension_semantics = [#tpu.dimension_semantics<parallel>], iteration_bounds = array<i64: 1>, scalar_prefetch = 0 : i64, scratch_operands = 0 : i64, tpu.core_type = #tpu.core_type<tc>, window_params = [{transform_indices = @transform_0, window_bounds = array<i64: 8, 16>}, {pipeline_mode = #tpu.pipeline_mode<synchronous>, transform_indices = @transform_1, window_bounds = array<i64: 1, 16>}, {pipeline_mode = #tpu.pipeline_mode<synchronous>, transform_indices = @transform_2, window_bounds = array<i64: 1, 16>}, {pipeline_mode = #tpu.pipeline_mode<synchronous>, transform_indices = @transform_3, window_bounds = array<i64: 1, 16>}, {pipeline_mode = #tpu.pipeline_mode<synchronous>, transform_indices = @transform_4, window_bounds = array<i64: 16, 32>}, {transform_indices = @transform_5, window_bounds = array<i64: 8, 32>}]} {
    %c0 = arith.constant 0 : index
    %c0_0 = arith.constant 0 : index
    %0 = vector.load %arg1[%c0, %c0_0] : memref<8x16xf32, #tpu.memory_space<vmem>>, vector<8x16xf32>
    %1 = math.log1p %0 : vector<8x16xf32>
    %c0_1 = arith.constant 0 : index
    %c0_2 = arith.constant 0 : index
    %2 = vector.load %arg2[%c0_1, %c0_2] : memref<1x16xf32, #tpu.memory_space<vmem>>, vector<1x16xf32>
    %3 = vector.broadcast %2 : vector<1x16xf32> to vector<8x16xf32>
    %4 = arith.mulf %1, %3 : vector<8x16xf32>
    %c0_3 = arith.constant 0 : index
    %c0_4 = arith.constant 0 : index
    %5 = vector.load %arg3[%c0_3, %c0_4] : memref<1x16xf32, #tpu.memory_space<vmem>>, vector<1x16xf32>
    %6 = vector.broadcast %5 : vector<1x16xf32> to vector<8x16xf32>
    %7 = arith.addf %4, %6 : vector<8x16xf32>
    %cst = arith.constant 5.000000e-01 : f32
    %8 = vector.broadcast %cst : f32 to vector<8x16xf32>
    %9 = arith.mulf %8, %7 : vector<8x16xf32>
    %10 = math.tanh %9 : vector<8x16xf32>
    %cst_5 = arith.constant 5.000000e-01 : f32
    %11 = vector.broadcast %cst_5 : f32 to vector<8x16xf32>
    %12 = arith.mulf %11, %10 : vector<8x16xf32>
    %c0_6 = arith.constant 0 : index
    %c0_7 = arith.constant 0 : index
    %13 = vector.load %arg4[%c0_6, %c0_7] : memref<1x16xf32, #tpu.memory_space<vmem>>, vector<1x16xf32>
    %cst_8 = arith.constant 5.000000e-01 : f32
    %14 = vector.broadcast %cst_8 : f32 to vector<1x16xf32>
    %15 = arith.subf %14, %13 : vector<1x16xf32>
    %16 = vector.broadcast %15 : vector<1x16xf32> to vector<8x16xf32>
    %17 = arith.addf %12, %16 : vector<8x16xf32>
    %c0_9 = arith.constant 0 : index
    %c0_10 = arith.constant 0 : index
    %18 = vector.load %arg5[%c0_9, %c0_10] : memref<16x32xf32, #tpu.memory_space<vmem>>, vector<16x32xf32>
    %cst_11 = arith.constant dense<0.000000e+00> : vector<8x32xf32>
    %19 = tpu.matmul %17, %18, %cst_11 {dimension_numbers = #tpu.dot_dimension_numbers<[1], [0], [0], [1], [0, 0, 1, 1], [], []>} : vector<8x16xf32>, vector<16x32xf32>, vector<8x32xf32> -> vector<8x32xf32>
    %c0_12 = arith.constant 0 : index
    %c0_13 = arith.constant 0 : index
    %20 = vector.load %arg6[%c0_12, %c0_13] : memref<8x32xf32, #tpu.memory_space<vmem>>, vector<8x32xf32>
    tpu.vector_store %arg6[%c0_12, %c0_13], %19 {strides = array<i32>} : memref<8x32xf32, #tpu.memory_space<vmem>>, vector<8x32xf32>,
    return
  }
  func.func @transform_0(%arg0: i32) -> (i32, i32) {
    %c0_i32 = arith.constant 0 : i32
    %c0_i32_0 = arith.constant 0 : i32
    return %arg0, %c0_i32 : i32, i32
  }
  func.func @transform_1(%arg0: i32) -> (i32, i32) {
    %c0_i32 = arith.constant 0 : i32
    %c0_i32_0 = arith.constant 0 : i32
    %c0_i32_1 = arith.constant 0 : i32
    return %c0_i32, %c0_i32_0 : i32, i32
  }
  func.func @transform_2(%arg0: i32) -> (i32, i32) {
    %c0_i32 = arith.constant 0 : i32
    %c0_i32_0 = arith.constant 0 : i32
    %c0_i32_1 = arith.constant 0 : i32
    return %c0_i32, %c0_i32_0 : i32, i32
  }
  func.func @transform_3(%arg0: i32) -> (i32, i32) {
    %c0_i32 = arith.constant 0 : i32
    %c0_i32_0 = arith.constant 0 : i32
    %c0_i32_1 = arith.constant 0 : i32
    return %c0_i32, %c0_i32_0 : i32, i32
  }
  func.func @transform_4(%arg0: i32) -> (i32, i32) {
    %c0_i32 = arith.constant 0 : i32
    %c0_i32_0 = arith.constant 0 : i32
    %c0_i32_1 = arith.constant 0 : i32
    return %c0_i32, %c0_i32_0 : i32, i32
  }
  func.func @transform_5(%arg0: i32) -> (i32, i32) {
    %c0_i32 = arith.constant 0 : i32
    %c0_i32_0 = arith.constant 0 : i32
    return %arg0, %c0_i32 : i32, i32
  }
}

</mosaic_0001>

<llo_original>
// kernel: tpu_custom_call.1
$region0: #{tpu_custom_call.1}
  #allocation0 [shape = 'u32[]', space=smem, size = 0x4, offset = 0x4, fixed_abs, tag = 'smem constant byte address 0x4 - core index']
  #allocation1 [shape = 'u32[144,128]{1,0:T(1,128)}', space=vmem, size = 0x12000, scoped, tag = 'internal scratch']
  %s0 = inlined_call_operand.hbm [shape: f32[8,16], index: 0, kind: input, shape index: {}]
  %s1 = inlined_call_operand.vmem [shape: f32[1,16], index: 1, kind: input, shape index: {}]
  %s2 = inlined_call_operand.vmem [shape: f32[1,16], index: 2, kind: input, shape index: {}]
  %s3 = inlined_call_operand.vmem [shape: f32[1,16], index: 3, kind: input, shape index: {}]
  %s4 = inlined_call_operand.hbm [shape: f32[16,32], index: 4, kind: input, shape index: {}]
  %s5 = inlined_call_operand.hbm [shape: f32[8,32], index: 5, kind: output, shape index: {}]
  %s6 = sld [smem:[#allocation0]]
  $region38: #{tpu_custom_call.1} parent=0
    _
  %s8 = ssub.s32 1, %s6
  %s9 = scalar_select 0, %s8, %s6
  $region1: #{tpu_custom_call.1} parent=0
    #allocation2 [shape = 'u8[4096]{0}', space=vmem, size = 0x1000, scoped, tag = 'input window, operand 0, single buffered']
    #allocation3 [shape = 's32[1]{0}', space=sflag, size = 0x4, scoped, tag = 'scoped memory for tpu_custom_call.1']
    #allocation4 [shape = 's32[1]{0}', space=sflag, size = 0x4, scoped, tag = 'scoped memory for tpu_custom_call.1']
    #allocation5 [shape = 'u8[8192]{0}', space=vmem, size = 0x2000, scoped, tag = 'input window, operand 4, single buffered']
    #allocation6 [shape = 's32[1]{0}', space=sflag, size = 0x4, scoped, tag = 'scoped memory for tpu_custom_call.1']
    #allocation7 [shape = 'u8[4096]{0}', space=vmem, size = 0x1000, scoped, tag = 'output window, operand 0, single buffered']
    %10 = vsyncpa [#allocation3], 0
    %11 = vsyncpa [#allocation6], 0
    %12 = vsyncpa [#allocation4], 0
    // Predicated region
    $region2: #{tpu_custom_call.1} parent=1 // pred_check
      _
    $region3: #{tpu_custom_call.1} parent=1 // pred_check_branch
      %14 = sbr.rel (0) target = $region5
    $region4: #{tpu_custom_call.1} parent=1 // pred_region
      %s16 = ssub.s32 128, 128
      %17 = vsyncadd [#allocation3], %s16
      %s19 = sshll.u32 [#allocation2], 4
      %s20 = int_to_ptr.vmem [resolvable:$true] %s19
      %22 = dma.hbm_to_vmem [thread:$0]  %s0, 128, %s20, [#allocation3]
    $region5: #{tpu_custom_call.1} parent=1 // pred_fallthru
      _
    // Predicated region
    $region6: #{tpu_custom_call.1} parent=1 // pred_check
      _
    $region7: #{tpu_custom_call.1} parent=1 // pred_check_branch
      %24 = sbr.rel (0) target = $region9
    $region8: #{tpu_custom_call.1} parent=1 // pred_region
      _
    $region9: #{tpu_custom_call.1} parent=1 // pred_fallthru
      _
    // Predicated region
    $region10: #{tpu_custom_call.1} parent=1 // pred_check
      _
    $region11: #{tpu_custom_call.1} parent=1 // pred_check_branch
      %26 = sbr.rel (0) target = $region13
    $region12: #{tpu_custom_call.1} parent=1 // pred_region
      _
    $region13: #{tpu_custom_call.1} parent=1 // pred_fallthru
      _
    // Predicated region
    $region14: #{tpu_custom_call.1} parent=1 // pred_check
      _
    $region15: #{tpu_custom_call.1} parent=1 // pred_check_branch
      %28 = sbr.rel (0) target = $region17
    $region16: #{tpu_custom_call.1} parent=1 // pred_region
      _
    $region17: #{tpu_custom_call.1} parent=1 // pred_fallthru
      _
    // Predicated region
    $region18: #{tpu_custom_call.1} parent=1 // pred_check
      _
    $region19: #{tpu_custom_call.1} parent=1 // pred_check_branch
      %30 = sbr.rel (0) target = $region21
    $region20: #{tpu_custom_call.1} parent=1 // pred_region
      %s32 = ssub.s32 256, 256
      %33 = vsyncadd [#allocation6], %s32
      %s34 = sshll.u32 [#allocation5], 4
      %s35 = int_to_ptr.vmem [resolvable:$true] %s34
      %40 = dma.hbm_to_vmem [thread:$0]  %s4, 256, %s35, [#allocation6], 128, 128, 8
    $region21: #{tpu_custom_call.1} parent=1 // pred_fallthru
      _
    // Predicated region
    $region22: #{tpu_custom_call.1} parent=1 // pred_check
      _
    $region23: #{tpu_custom_call.1} parent=1 // pred_check_branch
      %42 = sbr.rel (0) target = $region25
    $region24: #{tpu_custom_call.1} parent=1 // pred_region
      %43 = dma.done [#allocation3], 128
    $region25: #{tpu_custom_call.1} parent=1 // pred_fallthru
      _
    // Predicated region
    $region26: #{tpu_custom_call.1} parent=1 // pred_check
      _
    $region27: #{tpu_custom_call.1} parent=1 // pred_check_branch
      %45 = sbr.rel (0) target = $region29
    $region28: #{tpu_custom_call.1} parent=1 // pred_region
      %46 = dma.done [#allocation6], 256
    $region29: #{tpu_custom_call.1} parent=1 // pred_fallthru
      _
    %v47 = vld [vmem:[#allocation2] sm:$0xff]
    %v48 = vadd.f32 %v47, 1.0
    %v49 = vlog2.pop %v48
    %v50 = vmul.f32 %v49, 0.6931472
    %v51 = vmul.f32 -0.5, %v47
    %v52 = vadd.f32 %v51, 1.0
    %v53 = vmul.f32 %v52, %v47
    %v54 = vand.u32 2147483647, %v47
    %vm55 = vcmp.lt.f32.partialorder %v54, 0.0004427343
    %v56 = vsel %vm55, %v53, %v50
    %v57 = vld [vmem:[%s1] sm:$0x1]
    %v59 = vlaneseq
    %v60 = vshrl.u32 %v59, 7
    %v61 = vsub.s32 0, %v60
    %v62 = vrot.slane %v57, %v61
    %v64 = vmul.f32 %v56, %v62
    %v65 = vld [vmem:[%s2] sm:$0x1]
    %v67 = vlaneseq
    %v68 = vshrl.u32 %v67, 7
    %v69 = vsub.s32 0, %v68
    %v70 = vrot.slane %v65, %v69
    %v72 = vadd.f32 %v64, %v70
    %v73 = vmul.f32 %v72, 0.5
    %v74 = vtanh.pop %v73
    %v75 = vmul.f32 %v74, 0.5
    %v76 = vld [vmem:[%s3] sm:$0x1]
    %v77 = vsub.f32 0.5, %v76
    %v79 = vlaneseq
    %v80 = vshrl.u32 %v79, 7
    %v81 = vsub.s32 0, %v80
    %v82 = vrot.slane %v77, %v81
    %v84 = vadd.f32 %v75, %v82
    %v85 = vld [vmem:[#allocation5] sm:$0xff]
    %v86 = vld [vmem:[#allocation5 + $0x8] sm:$0xff]
    %vm87 = vcmask 130048
    %v89 = vsel %vm87, %v84, 0
    %91 = vmatprep.subr.mxu0 0.0
    %92 = vmatpush1.msra.mxu0 %v85
    %93 = vmatprep.subr.mxu0 0.0
    %94 = vmatpush1.msra.mxu0 %v86
    %95 = vmatprep.subr.mxu0 0.0
    %96 = vmatpush1.msra.mxu0 0.0
    %97 = vmatprep.subr.mxu0 0.0
    %98 = vmatpush1.msra.mxu0 0.0
    %99 = vmatprep.subr.mxu0 0.0
    %100 = vmatpush1.msra.mxu0 0.0
    %101 = vmatprep.subr.mxu0 0.0
    %102 = vmatpush1.msra.mxu0 0.0
    %103 = vmatprep.subr.mxu0 0.0
    %104 = vmatpush1.msra.mxu0 0.0
    %105 = vmatprep.subr.mxu0 0.0
    %106 = vmatpush1.msra.mxu0 0.0
    %107 = vmatprep.subr.mxu0 0.0
    %108 = vmatpush1.msra.mxu0 0.0
    %109 = vmatprep.subr.mxu0 0.0
    %110 = vmatpush1.msra.mxu0 0.0
    %111 = vmatprep.subr.mxu0 0.0
    %112 = vmatpush1.msra.mxu0 0.0
    %113 = vmatprep.subr.mxu0 0.0
    %114 = vmatpush1.msra.mxu0 0.0
    %115 = vmatprep.subr.mxu0 0.0
    %116 = vmatpush1.msra.mxu0 0.0
    %117 = vmatprep.subr.mxu0 0.0
    %118 = vmatpush1.msra.mxu0 0.0
    %119 = vmatprep.subr.mxu0 0.0
    %120 = vmatpush1.msra.mxu0 0.0
    %121 = vmatprep.subr.mxu0 0.0
    %122 = vmatpush1.msra.mxu0 0.0
    %123 = vmatprep.subr.mxu0 0.0
    %124 = vmatpush1.msra.mxu0 0.0
    %125 = vmatprep.subr.mxu0 0.0
    %126 = vmatpush1.msra.mxu0 0.0
    %127 = vmatprep.subr.mxu0 0.0
    %128 = vmatpush1.msra.mxu0 0.0
    %129 = vmatprep.subr.mxu0 0.0
    %130 = vmatpush1.msra.mxu0 0.0
    %131 = vmatprep.subr.mxu0 0.0
    %132 = vmatpush1.msra.mxu0 0.0
    %133 = vmatprep.subr.mxu0 0.0
    %134 = vmatpush1.msra.mxu0 0.0
    %135 = vmatprep.subr.mxu0 0.0
    %136 = vmatpush1.msra.mxu0 0.0
    %137 = vmatprep.subr.mxu0 0.0
    %138 = vmatpush1.msra.mxu0 0.0
    %139 = vmatprep.subr.mxu0 0.0
    %140 = vmatpush1.msra.mxu0 0.0
    %141 = vmatprep.subr.mxu0 0.0
    %142 = vmatpush1.msra.mxu0 0.0
    %143 = vmatprep.subr.mxu0 0.0
    %144 = vmatpush1.msra.mxu0 0.0
    %145 = vmatprep.subr.mxu0 0.0
    %146 = vmatpush1.msra.mxu0 0.0
    %147 = vmatprep.subr.mxu0 0.0
    %148 = vmatpush1.msra.mxu0 0.0
    %149 = vmatprep.subr.mxu0 0.0
    %150 = vmatpush1.msra.mxu0 0.0
    %151 = vmatprep.subr.mxu0 0.0
    %152 = vmatpush1.msra.mxu0 0.0
    %153 = vmatprep.subr.mxu0 0.0
    %154 = vmatpush1.msra.mxu0 0.0
    %155 = vmatprep.mubr.f32.mxu0 0.0
    %156 = vmatmul.mubr.f32.gmra.mrb[0].mxu0 %v89
    %v157 = vpop.f32.mrb[0].mxu0
    %v158 = vadd.f32 0.0, %v157
    %v159 = vpop.f32.mrb[0].mxu0
    %160 = vdwg.mxu0
    %vm161 = vcmask 261120
    %162 = vst.msk [vmem:[#allocation7] sm:$0xff] %vm161, %v158
    // Predicated region
    $region30: #{tpu_custom_call.1} parent=1 // pred_check
      _
    $region31: #{tpu_custom_call.1} parent=1 // pred_check_branch
      %164 = sbr.rel (0) target = $region33
    $region32: #{tpu_custom_call.1} parent=1 // pred_region
      %s166 = ssub.s32 128, 128
      %167 = vsyncadd [#allocation4], %s166
      %s169 = sshll.u32 [#allocation7], 4
      %s170 = int_to_ptr.vmem [resolvable:$true] %s169
      %172 = dma.vmem_to_hbm [thread:$0]  %s170, 128, %s5, [#allocation4]
    $region33: #{tpu_custom_call.1} parent=1 // pred_fallthru
      _
    // Predicated region
    $region34: #{tpu_custom_call.1} parent=1 // pred_check
      _
    $region35: #{tpu_custom_call.1} parent=1 // pred_check_branch
      %174 = sbr.rel (0) target = $region37
    $region36: #{tpu_custom_call.1} parent=1 // pred_region
      %175 = dma.done [#allocation4], 128
    $region37: #{tpu_custom_call.1} parent=1 // pred_fallthru
      _
    %176 = vsyncpa [#allocation3], 1
    %177 = vsyncpa [#allocation6], 1
    %178 = vsyncpa [#allocation4], 1

</llo_original>
